<compile_context>
chip_gen: v6e
topology: v6e:2x2x1
jax: 0.10.0
libtpu: 0.0.40
codegen_flags: <defaults>
</compile_context>

<pallas_src>
import math

import jax
import jax.numpy as jnp
from jax.experimental import pallas as pl
from jax.experimental.pallas import tpu as pltpu


def make_embedding(d: int, T: int) -> jnp.ndarray:
    """Replicates the PyTorch __init__ buffer construction deterministically."""
    pos = jnp.arange(T, dtype=jnp.float32)[:, None]                       # (T, 1)
    idx = jnp.arange(0, d * d, 2, dtype=jnp.float32)                      # (d*d/2,)
    div_term = jnp.exp(idx * (-math.log(10000.0) / (d * d)))              # (d*d/2,)
    angles = pos * div_term                                               # (T, d*d/2)
    sin_part = jnp.sin(angles)
    cos_part = jnp.cos(angles)[:, : (d * d) // 2]
    # interleave: even cols = sin, odd cols = cos
    emb = jnp.stack([sin_part, cos_part], axis=-1).reshape(T, d * d)
    return emb.reshape(T, d, d).astype(jnp.float32)


def _add_emb_kernel(x_ref, emb_ref, o_ref):
    # x_ref:   (bb, C, D)  block of batch rows, lane-dense last axis (D = d*d)
    # emb_ref: (bb, 1, D)  per-batch embedding row (already gathered by t)
    # o_ref:   (bb, C, D)
    # Natural broadcast over the channel axis; pure load / add / store.
    o_ref[...] = x_ref[...] + emb_ref[...]


def timestamp_embedding_2d(x: jnp.ndarray, t: jnp.ndarray,
                           embedding: jnp.ndarray,
                           *, target_block_bytes: int = 4 << 20) -> jnp.ndarray:
    B, C, d, d2 = x.shape
    assert d == d2
    T = embedding.shape[0]
    assert embedding.shape == (T, d, d)
    D = d * d

    # Free, contiguous reshape -> lane-dense last axis (D is a multiple of 128
    # for d = 16; otherwise the full-extent block is still legal).
    x_flat = x.reshape(B, C, D)

    # Gather outside the kernel: the table is only T*D*4 bytes, so jnp.take is
    # essentially free, and it lets blocks span several batch rows without a
    # data-dependent index_map.
    emb_t = jnp.take(embedding.reshape(T, D), t, axis=0).reshape(B, 1, D)

    # Per-batch-row x/out tile size in VMEM (account for sublane padding of C
    # up to a multiple of 8). Keep each buffer <= ~4 MiB so that with
    # double-buffered in/out buffers the kernel fits v7x's 32 MiB scoped VMEM
    # without touching vmem_limit_bytes.
    c_pad = ((C + 7) // 8) * 8
    bytes_per_row = c_pad * D * x.dtype.itemsize
    bb = max(1, min(B, target_block_bytes // max(1, bytes_per_row)))
    grid = (pl.cdiv(B, bb),)

    out = pl.pallas_call(
        _add_emb_kernel,
        out_shape=jax.ShapeDtypeStruct((B, C, D), x.dtype),
        grid_spec=pltpu.PrefetchScalarGridSpec(
            num_scalar_prefetch=0,
            grid=grid,
            in_specs=[
                pl.BlockSpec((bb, C, D), lambda i: (i, 0, 0)),
                pl.BlockSpec((bb, 1, D), lambda i: (i, 0, 0)),
            ],
            out_specs=pl.BlockSpec((bb, C, D), lambda i: (i, 0, 0)),
        ),
        compiler_params=pltpu.CompilerParams(
            dimension_semantics=("parallel",)),   # batch blocks are independent
    )(x_flat, emb_t)

    return out.reshape(B, C, d, d)


if __name__ == "__main__":
    B, C, d, T = 2, 4, 16, 32

    key = jax.random.PRNGKey(0)
    kx, kt = jax.random.split(key)
    x = jax.random.normal(kx, (B, C, d, d), dtype=jnp.float32)
    t = jax.random.randint(kt, (B,), 0, T, dtype=jnp.int32)

    embedding = make_embedding(d, T)

    out = timestamp_embedding_2d(x, t, embedding)
    out = jax.block_until_ready(out)

    # reference check in plain JAX
    ref = x + embedding[t][:, None, :, :]
    assert out.shape == (B, C, d, d)
    assert jnp.allclose(out, ref, atol=1e-6), "mismatch vs reference"

    print("KERNEL_OK")
</pallas_src>

<mosaic_0001>
module attributes {stable_mosaic.version = 11 : i64} {
  func.func @_add_emb_kernel(%arg0: i32, %arg1: memref<2x4x256xf32, #tpu.memory_space<vmem>>, %arg2: memref<2x1x256xf32, #tpu.memory_space<vmem>>, %arg3: memref<2x4x256xf32, #tpu.memory_space<vmem>>) attributes {dimension_semantics = [#tpu.dimension_semantics<parallel>], iteration_bounds = array<i64: 1>, scalar_prefetch = 0 : i64, scratch_operands = 0 : i64, tpu.core_type = #tpu.core_type<tc>, window_params = [{transform_indices = @transform_0, window_bounds = array<i64: 2, 4, 256>}, {transform_indices = @transform_1, window_bounds = array<i64: 2, 1, 256>}, {transform_indices = @transform_2, window_bounds = array<i64: 2, 4, 256>}]} {
    %c0 = arith.constant 0 : index
    %c0_0 = arith.constant 0 : index
    %c0_1 = arith.constant 0 : index
    %0 = vector.load %arg1[%c0, %c0_0, %c0_1] : memref<2x4x256xf32, #tpu.memory_space<vmem>>, vector<2x4x256xf32>
    %c0_2 = arith.constant 0 : index
    %c0_3 = arith.constant 0 : index
    %c0_4 = arith.constant 0 : index
    %1 = vector.load %arg2[%c0_2, %c0_3, %c0_4] : memref<2x1x256xf32, #tpu.memory_space<vmem>>, vector<2x1x256xf32>
    %2 = vector.broadcast %1 : vector<2x1x256xf32> to vector<2x4x256xf32>
    %3 = arith.addf %0, %2 : vector<2x4x256xf32>
    %c0_5 = arith.constant 0 : index
    %c0_6 = arith.constant 0 : index
    %c0_7 = arith.constant 0 : index
    %4 = vector.load %arg3[%c0_5, %c0_6, %c0_7] : memref<2x4x256xf32, #tpu.memory_space<vmem>>, vector<2x4x256xf32>
    tpu.vector_store %arg3[%c0_5, %c0_6, %c0_7], %3 {strides = array<i32>} : memref<2x4x256xf32, #tpu.memory_space<vmem>>, vector<2x4x256xf32>,
    return
  }
  func.func @transform_0(%arg0: i32) -> (i32, i32, i32) {
    %c0_i32 = arith.constant 0 : i32
    %c0_i32_0 = arith.constant 0 : i32
    %c0_i32_1 = arith.constant 0 : i32
    return %arg0, %c0_i32, %c0_i32_0 : i32, i32, i32
  }
  func.func @transform_1(%arg0: i32) -> (i32, i32, i32) {
    %c0_i32 = arith.constant 0 : i32
    %c0_i32_0 = arith.constant 0 : i32
    %c0_i32_1 = arith.constant 0 : i32
    return %arg0, %c0_i32, %c0_i32_0 : i32, i32, i32
  }
  func.func @transform_2(%arg0: i32) -> (i32, i32, i32) {
    %c0_i32 = arith.constant 0 : i32
    %c0_i32_0 = arith.constant 0 : i32
    %c0_i32_1 = arith.constant 0 : i32
    return %arg0, %c0_i32, %c0_i32_0 : i32, i32, i32
  }
}

</mosaic_0001>

<llo_original>
// kernel: tpu_custom_call.1
$region0: #{tpu_custom_call.1}
  #allocation0 [shape = 'u32[]', space=smem, size = 0x4, offset = 0x4, fixed_abs, tag = 'smem constant byte address 0x4 - core index']
  #allocation1 [shape = 'u32[144,128]{1,0:T(1,128)}', space=vmem, size = 0x12000, scoped, tag = 'internal scratch']
  %s0 = inlined_call_operand.hbm [shape: f32[2,4,256], index: 0, kind: input, shape index: {}]
  %s1 = inlined_call_operand.hbm [shape: f32[2,1,256], index: 1, kind: input, shape index: {}]
  %s2 = inlined_call_operand.hbm [shape: f32[2,4,256], index: 2, kind: output, shape index: {}]
  %s3 = sld [smem:[#allocation0]]
  $region26: #{tpu_custom_call.1} parent=0
    _
  %s5 = ssub.s32 1, %s3
  %s6 = scalar_select 0, %s5, %s3
  $region1: #{tpu_custom_call.1} parent=0
    #allocation2 [shape = 'u8[8192]{0}', space=vmem, size = 0x2000, scoped, tag = 'input window, operand 0, single buffered']
    #allocation3 [shape = 's32[1]{0}', space=sflag, size = 0x4, scoped, tag = 'scoped memory for tpu_custom_call.1']
    #allocation4 [shape = 's32[1]{0}', space=sflag, size = 0x4, scoped, tag = 'scoped memory for tpu_custom_call.1']
    #allocation5 [shape = 'u8[2048]{0}', space=vmem, size = 0x800, scoped, tag = 'input window, operand 1, single buffered']
    #allocation6 [shape = 's32[1]{0}', space=sflag, size = 0x4, scoped, tag = 'scoped memory for tpu_custom_call.1']
    #allocation7 [shape = 'u8[8192]{0}', space=vmem, size = 0x2000, scoped, tag = 'output window, operand 0, single buffered']
    %7 = vsyncpa [#allocation3], 0
    %8 = vsyncpa [#allocation6], 0
    %9 = vsyncpa [#allocation4], 0
    // Predicated region
    $region2: #{tpu_custom_call.1} parent=1 // pred_check
      _
    $region3: #{tpu_custom_call.1} parent=1 // pred_check_branch
      %11 = sbr.rel (0) target = $region5
    $region4: #{tpu_custom_call.1} parent=1 // pred_region
      %s13 = ssub.s32 256, 256
      %14 = vsyncadd [#allocation3], %s13
      %s15 = sshll.u32 [#allocation2], 4
      %s16 = int_to_ptr.vmem [resolvable:$true] %s15
      %21 = dma.hbm_to_vmem [thread:$0]  %s0, 256, %s16, [#allocation3], 128, 128, 8
    $region5: #{tpu_custom_call.1} parent=1 // pred_fallthru
      _
    // Predicated region
    $region6: #{tpu_custom_call.1} parent=1 // pred_check
      _
    $region7: #{tpu_custom_call.1} parent=1 // pred_check_branch
      %23 = sbr.rel (0) target = $region9
    $region8: #{tpu_custom_call.1} parent=1 // pred_region
      %s25 = ssub.s32 64, 64
      %26 = vsyncadd [#allocation6], %s25
      %s27 = sshll.u32 [#allocation5], 4
      %s28 = int_to_ptr.vmem [resolvable:$true] %s27
      %33 = dma.hbm_to_vmem [thread:$0]  %s1, 64, %s28, [#allocation6], 32, 32, 2
    $region9: #{tpu_custom_call.1} parent=1 // pred_fallthru
      _
    // Predicated region
    $region10: #{tpu_custom_call.1} parent=1 // pred_check
      _
    $region11: #{tpu_custom_call.1} parent=1 // pred_check_branch
      %35 = sbr.rel (0) target = $region13
    $region12: #{tpu_custom_call.1} parent=1 // pred_region
      %36 = dma.done [#allocation3], 256
    $region13: #{tpu_custom_call.1} parent=1 // pred_fallthru
      _
    // Predicated region
    $region14: #{tpu_custom_call.1} parent=1 // pred_check
      _
    $region15: #{tpu_custom_call.1} parent=1 // pred_check_branch
      %38 = sbr.rel (0) target = $region17
    $region16: #{tpu_custom_call.1} parent=1 // pred_region
      %39 = dma.done [#allocation6], 64
    $region17: #{tpu_custom_call.1} parent=1 // pred_fallthru
      _
    %v40 = vld [vmem:[#allocation2] sm:$0xff]
    %v41 = vld [vmem:[#allocation2 + $0x8] sm:$0xff]
    %v42 = vld [vmem:[#allocation5] sm:$0x3]
    %v43 = vld [vmem:[#allocation5 + $0x2] sm:$0x3]
    %v46 = vlaneseq
    %v47 = vshrl.u32 %v46, 7
    %v48 = vsub.s32 0, %v47
    %v49 = vrot.slane %v42, %v48
    %v50 = vlaneseq
    %v51 = vshrl.u32 %v50, 7
    %v52 = vsub.s32 1, %v51
    %v53 = vrot.slane %v42, %v52
    %v54 = vlaneseq
    %v55 = vshrl.u32 %v54, 7
    %v56 = vsub.s32 0, %v55
    %v57 = vrot.slane %v43, %v56
    %v58 = vlaneseq
    %v59 = vshrl.u32 %v58, 7
    %v60 = vsub.s32 1, %v59
    %v61 = vrot.slane %v43, %v60
    %v62 = vcombine.low %v49, %v53
    %v63 = vcombine.low %v57, %v61
    %v66 = vadd.f32 %v40, %v62
    %v67 = vadd.f32 %v41, %v63
    %68 = vst [vmem:[#allocation7] sm:$0xff] %v66
    %69 = vst [vmem:[#allocation7 + $0x8] sm:$0xff] %v67
    // Predicated region
    $region18: #{tpu_custom_call.1} parent=1 // pred_check
      _
    $region19: #{tpu_custom_call.1} parent=1 // pred_check_branch
      %71 = sbr.rel (0) target = $region21
    $region20: #{tpu_custom_call.1} parent=1 // pred_region
      %s73 = ssub.s32 256, 256
      %74 = vsyncadd [#allocation4], %s73
      %s75 = sshll.u32 [#allocation7], 4
      %s76 = int_to_ptr.vmem [resolvable:$true] %s75
      %81 = dma.vmem_to_hbm [thread:$0]  %s76, 256, %s2, [#allocation4], 128, 128, 8
    $region21: #{tpu_custom_call.1} parent=1 // pred_fallthru
      _
    // Predicated region
    $region22: #{tpu_custom_call.1} parent=1 // pred_check
      _
    $region23: #{tpu_custom_call.1} parent=1 // pred_check_branch
      %83 = sbr.rel (0) target = $region25
    $region24: #{tpu_custom_call.1} parent=1 // pred_region
      %84 = dma.done [#allocation4], 256
    $region25: #{tpu_custom_call.1} parent=1 // pred_fallthru
      _
    %85 = vsyncpa [#allocation3], 1
    %86 = vsyncpa [#allocation6], 1
    %87 = vsyncpa [#allocation4], 1

</llo_original>
